<compile_context>
chip_gen: v6e
topology: v6e:2x2x1
jax: 0.10.0
libtpu: 0.0.40
codegen_flags: <defaults>
</compile_context>

<pallas_src>
import jax
import jax.numpy as jnp
from jax import lax
from jax.experimental import pallas as pl
from jax.experimental.pallas import tpu as pltpu


def _round_up(x, m):
    return ((x + m - 1) // m) * m


def _choose_tm(m, tm_max):
    """Row-tile choice: multiple of 16 (bf16 sublane packing); >=2 grid steps
    when the stream spans more than one minimal tile (v7x has 2 TensorCores);
    tiny streams use a single full-array block."""
    if m <= 16:
        return m                                  # full block (== array dim)
    tm = min(tm_max, _round_up(m, 16))
    if tm >= m:                                   # keep >= 2 grid steps
        tm = max(16, _round_up(pl.cdiv(m, 2), 16))
    return tm


# --------------------------- fused path kernel ------------------------------

def _make_fused_kernel(has_cont, vocab_sizes, compute_dtype):
    """multi-hot(cat indices [+ always-hot bias col]) @ packed tables
       (+ x_cont @ packed W^T), f32 accumulation, interleaved output columns."""
    vocab_sizes = tuple(int(v) for v in vocab_sizes)
    bias_cols = 1 if has_cont else 0
    offsets = []
    off = bias_cols
    for v in vocab_sizes:
        offsets.append(off)
        off += v
    offsets = tuple(offsets)
    k_cat = off                                   # bias row (optional) + sum(V)

    def kernel(*refs):
        if has_cont:
            x_ref, idx_ref, rhs_cont_ref, rhs_cat_ref, o_ref = refs
        else:
            idx_ref, rhs_cat_ref, o_ref = refs

        idx = idx_ref[...]                                    # [tm, n_cat] int32
        tm = idx.shape[0]
        col = lax.broadcasted_iota(jnp.int32, (tm, k_cat), 1)

        # Multi-hot over the concatenated vocabularies (disjoint segments);
        # column 0 is an always-hot bias column when the path has a Linear.
        hit = (col == 0) if has_cont else None
        for i, (seg_off, v_i) in enumerate(zip(offsets, vocab_sizes)):
            ids = idx[:, i:i + 1]                             # [tm, 1]
            valid = jnp.logical_and(ids >= 0, ids < v_i)      # OOB -> zero row
            h = jnp.logical_and(col == ids + seg_off, valid)
            hit = h if hit is None else jnp.logical_or(hit, h)
        oh = hit.astype(compute_dtype)                        # [tm, k_cat]

        # One MXU matmul over all tables (+ bias row) at once; f32 accumulate.
        acc = jnp.dot(oh, rhs_cat_ref[...],
                      preferred_element_type=jnp.float32)     # [tm, n_pad]
        if has_cont:
            acc = acc + jnp.dot(x_ref[...], rhs_cont_ref[...],
                                preferred_element_type=jnp.float32)
        o_ref[...] = acc.astype(o_ref.dtype)

    return kernel


def _fused_path(x_cont, idx, rhs_cont, rhs_cat, vocab_sizes, n_true,
                *, compute_dtype, out_dtype=jnp.float32, tm_max=1024):
    """One pallas_call for a whole token-stream path.

    x_cont : [M, F] compute_dtype or None
    idx    : [M, n_cat] int32
    rhs_*  : pre-packed, column-interleaved weight blocks (compute_dtype)
    returns [M, n_true] out_dtype, columns laid out as h*n_groups + g
    (group 0 = continuous Linear if present, then the tables in order).
    """
    M, n_cat = idx.shape
    k_cat, n_pad = rhs_cat.shape
    has_cont = x_cont is not None

    tm = _choose_tm(M, tm_max)
    grid = (pl.cdiv(M, tm),)

    kernel = _make_fused_kernel(has_cont, vocab_sizes, compute_dtype)

    if has_cont:
        f = x_cont.shape[1]
        args = [x_cont, idx, rhs_cont, rhs_cat]
        in_specs = [
            pl.BlockSpec((tm, f), lambda i: (i, 0)),
            pl.BlockSpec((tm, n_cat), lambda i: (i, 0)),
            pl.BlockSpec(rhs_cont.shape, lambda i: (0, 0)),
            pl.BlockSpec(rhs_cat.shape, lambda i: (0, 0)),
        ]
        k_total = k_cat + f
    else:
        args = [idx, rhs_cat]
        in_specs = [
            pl.BlockSpec((tm, n_cat), lambda i: (i, 0)),
            pl.BlockSpec(rhs_cat.shape, lambda i: (0, 0)),
        ]
        k_total = k_cat

    flops = 2 * M * k_total * n_pad
    bytes_accessed = (sum(int(a.size) * a.dtype.itemsize for a in args)
                      + M * n_pad * jnp.dtype(out_dtype).itemsize)

    out = pl.pallas_call(
        kernel,
        out_shape=jax.ShapeDtypeStruct((M, n_pad), out_dtype),
        grid=grid,
        in_specs=in_specs,
        out_specs=pl.BlockSpec((tm, n_pad), lambda i: (i, 0)),
        compiler_params=pltpu.CompilerParams(
            dimension_semantics=("parallel",)),
        cost_estimate=pl.CostEstimate(
            flops=flops, transcendentals=0, bytes_accessed=bytes_accessed),
    )(*args)
    if n_pad != n_true:
        out = out[:, :n_true]
    return out


# ------------------------ packed parameter builders -------------------------

def _build_fused_params(cont_w, cont_b, tables, hidden, compute_dtype):
    """Pack all per-path weights into lane-padded, column-INTERLEAVED blocks.

    Output column index = h * n_groups + g (H-major, group-minor), so the
    kernel output reshapes directly to [..., H, n_groups] with no transpose.
    Group 0 = continuous Linear (if present), groups 1.. = embedding tables.
    rhs_cat rows: [bias row (if cont)] + table rows; rhs_cont rows: W^T.
    """
    vocab_sizes = tuple(int(t.shape[0]) for t in tables)
    sum_v = sum(vocab_sizes)
    has_cont = cont_w is not None
    n_groups = (1 if has_cont else 0) + len(tables)
    n_true = n_groups * hidden
    n_pad = _round_up(n_true, 128)

    k_cat = (1 if has_cont else 0) + sum_v
    cat = jnp.zeros((k_cat, n_groups, hidden), jnp.float32)
    row, g = 0, 0
    if has_cont:
        cat = cat.at[0, 0, :].set(cont_b)          # bias row -> always-hot col
        row, g = 1, 1
    for t in tables:
        v = int(t.shape[0])
        cat = cat.at[row:row + v, g, :].set(t)
        row += v
        g += 1
    cat = cat.transpose(0, 2, 1).reshape(k_cat, n_true)   # interleave columns
    rhs_cat = (jnp.zeros((k_cat, n_pad), jnp.float32)
               .at[:, :n_true].set(cat).astype(compute_dtype))

    rhs_cont = None
    if has_cont:
        f = int(cont_w.shape[1])
        cont = (jnp.zeros((f, n_groups, hidden), jnp.float32)
                .at[:, 0, :].set(cont_w.T))               # pre-transposed
        cont = cont.transpose(0, 2, 1).reshape(f, n_true)
        rhs_cont = (jnp.zeros((f, n_pad), jnp.float32)
                    .at[:, :n_true].set(cont).astype(compute_dtype))

    return rhs_cont, rhs_cat, vocab_sizes, n_true, n_pad


# ------------------------------ module wrapper -------------------------------

class TFTEmbeddingPallas:
    def __init__(self, static_cont_feature_num, static_cat_feature_num_list,
                 history_cont_feature_num, history_cat_feature_num_list,
                 future_cat_feature_num_list, hidden_size, key,
                 compute_dtype=jnp.bfloat16, out_dtype=jnp.float32,
                 tile_m=1024):
        self.hidden_size = hidden_size
        self.compute_dtype = compute_dtype
        self.out_dtype = out_dtype
        self.tile_m = tile_m
        ks = iter(jax.random.split(key, 64))

        def lin(fan_in):
            bound = 1.0 / float(fan_in) ** 0.5
            w = jax.random.uniform(next(ks), (hidden_size, fan_in),
                                   minval=-bound, maxval=bound,
                                   dtype=jnp.float32)
            b = jax.random.uniform(next(ks), (hidden_size,),
                                   minval=-bound, maxval=bound,
                                   dtype=jnp.float32)
            return w, b

        def emb(num):
            return jax.random.normal(next(ks), (num, hidden_size),
                                     dtype=jnp.float32)

        # f32 master parameters (PyTorch-style init) kept for reference checks.
        self.static_cont_w, self.static_cont_b = lin(static_cont_feature_num)
        self.history_cont_w, self.history_cont_b = lin(history_cont_feature_num)
        self.static_cat_tables = [emb(n) for n in static_cat_feature_num_list]
        self.history_cat_tables = [emb(n) for n in history_cat_feature_num_list]
        self.future_tables = [emb(n) for n in future_cat_feature_num_list]

        # Fused / pre-transposed / column-interleaved / lane-padded operands,
        # built ONCE at init.
        (self._s_rhs_cont, self._s_rhs_cat,
         self._s_vocabs, self._s_n, _) = _build_fused_params(
            self.static_cont_w, self.static_cont_b, self.static_cat_tables,
            hidden_size, compute_dtype)
        (self._h_rhs_cont, self._h_rhs_cat,
         self._h_vocabs, self._h_n, _) = _build_fused_params(
            self.history_cont_w, self.history_cont_b, self.history_cat_tables,
            hidden_size, compute_dtype)
        (_, self._f_rhs_cat,
         self._f_vocabs, self._f_n, _) = _build_fused_params(
            None, None, self.future_tables, hidden_size, compute_dtype)

        # Whole forward (3 fused pallas_calls + reshape glue, no transposes).
        self._forward = jax.jit(self._forward_impl)

    def _forward_impl(self, static_cont_input, static_cat_input,
                      history_cont_input, history_cat_input, future_input):
        H = self.hidden_size
        cd = self.compute_dtype
        od = self.out_dtype
        B = static_cont_input.shape[0]
        _, T_h, F_hc = history_cont_input.shape
        T_f = future_input.shape[1]

        # static path: 1 kernel -> [B, (1+n_sc)*H] (interleaved) -> [B, H, 1+n_sc]
        stat = _fused_path(
            static_cont_input.astype(cd), static_cat_input.astype(jnp.int32),
            self._s_rhs_cont, self._s_rhs_cat, self._s_vocabs, self._s_n,
            compute_dtype=cd, out_dtype=od, tm_max=self.tile_m)
        static_input = stat.reshape(B, H, 1 + len(self._s_vocabs))

        # history path: 1 kernel -> [B*T_h, (1+n_hc)*H] -> [B, T_h, H, 1+n_hc]
        hist = _fused_path(
            history_cont_input.reshape(B * T_h, F_hc).astype(cd),
            history_cat_input.reshape(B * T_h, -1).astype(jnp.int32),
            self._h_rhs_cont, self._h_rhs_cat, self._h_vocabs, self._h_n,
            compute_dtype=cd, out_dtype=od, tm_max=self.tile_m)
        history_input = hist.reshape(B, T_h, H, 1 + len(self._h_vocabs))

        # future path: 1 kernel -> [B*T_f, n_f*H] -> [B, T_f, H, n_f]
        fut = _fused_path(
            None, future_input.reshape(B * T_f, -1).astype(jnp.int32),
            None, self._f_rhs_cat, self._f_vocabs, self._f_n,
            compute_dtype=cd, out_dtype=od, tm_max=self.tile_m)
        future_embs = fut.reshape(B, T_f, H, len(self._f_vocabs))

        return static_input, history_input, future_embs

    def __call__(self, *inputs):
        return self._forward(*inputs)


# ---------------------------------- main ------------------------------------

if __name__ == "__main__":
    key = jax.random.PRNGKey(0)
    k_param, k_sc, k_scat, k_hc, k_hcat, k_fut = jax.random.split(key, 6)

    B, T_h, T_f, H = 2, 8, 4, 32
    static_cont_feature_num = 3
    static_cat_feature_num_list = [5, 7]
    history_cont_feature_num = 6
    history_cat_feature_num_list = [4, 9]
    future_cat_feature_num_list = [11, 3, 6]

    model = TFTEmbeddingPallas(
        static_cont_feature_num, static_cat_feature_num_list,
        history_cont_feature_num, history_cat_feature_num_list,
        future_cat_feature_num_list, hidden_size=H, key=k_param)

    static_cont_input = jax.random.normal(
        k_sc, (B, static_cont_feature_num), dtype=jnp.float32)
    static_cat_input = jnp.stack(
        [jax.random.randint(jax.random.fold_in(k_scat, i), (B,), 0, n)
         for i, n in enumerate(static_cat_feature_num_list)], axis=-1
    ).astype(jnp.int32)
    history_cont_input = jax.random.normal(
        k_hc, (B, T_h, history_cont_feature_num), dtype=jnp.float32)
    history_cat_input = jnp.stack(
        [jax.random.randint(jax.random.fold_in(k_hcat, i), (B, T_h), 0, n)
         for i, n in enumerate(history_cat_feature_num_list)], axis=-1
    ).astype(jnp.int32)
    future_input = jnp.stack(
        [jax.random.randint(jax.random.fold_in(k_fut, i), (B, T_f), 0, n)
         for i, n in enumerate(future_cat_feature_num_list)], axis=-1
    ).astype(jnp.int32)

    static_input, history_input, future_embs = model(
        static_cont_input, static_cat_input, history_cont_input,
        history_cat_input, future_input)
    jax.block_until_ready((static_input, history_input, future_embs))

    assert static_input.shape == (B, H, 1 + len(static_cat_feature_num_list))
    assert history_input.shape == (B, T_h, H,
                                   1 + len(history_cat_feature_num_list))
    assert future_embs.shape == (B, T_f, H, len(future_cat_feature_num_list))

    # ---- reference (plain JAX, same bf16-quantized operands, f32 accum) ----
    cd = model.compute_dtype

    def q(a):  # quantize exactly as the packed kernel operands are
        return a.astype(cd).astype(jnp.float32)

    def ref_linear(x, w, b):
        return q(x) @ q(w).T + q(b)

    def ref_emb(idx, tbl):
        return q(tbl)[idx]

    ref_static = jnp.concatenate(
        [ref_linear(static_cont_input, model.static_cont_w,
                    model.static_cont_b)[..., None]]
        + [ref_emb(static_cat_input[:, i], t)[..., None]
           for i, t in enumerate(model.static_cat_tables)], axis=-1)
    ref_history = jnp.concatenate(
        [ref_linear(history_cont_input, model.history_cont_w,
                    model.history_cont_b)[..., None]]
        + [ref_emb(history_cat_input[:, :, i], t)[..., None]
           for i, t in enumerate(model.history_cat_tables)], axis=-1)
    ref_future = jnp.stack(
        [ref_emb(future_input[:, :, i], t)
         for i, t in enumerate(model.future_tables)], axis=-1)

    assert jnp.allclose(static_input, ref_static, atol=1e-4, rtol=1e-4)
    assert jnp.allclose(history_input, ref_history, atol=1e-4, rtol=1e-4)
    assert jnp.allclose(future_embs, ref_future, atol=1e-4, rtol=1e-4)

    print("KERNEL_OK")
</pallas_src>

<mosaic_0001>
module attributes {stable_mosaic.version = 11 : i64} {
  func.func @kernel(%arg0: i32, %arg1: memref<16x6xbf16, #tpu.memory_space<vmem>>, %arg2: memref<16x2xi32, #tpu.memory_space<vmem>>, %arg3: memref<6x128xbf16, #tpu.memory_space<vmem>>, %arg4: memref<14x128xbf16, #tpu.memory_space<vmem>>, %arg5: memref<16x128xf32, #tpu.memory_space<vmem>>) attributes {dimension_semantics = [#tpu.dimension_semantics<parallel>], iteration_bounds = array<i64: 1>, scalar_prefetch = 0 : i64, scratch_operands = 0 : i64, tpu.core_type = #tpu.core_type<tc>, window_params = [{transform_indices = @transform_0, window_bounds = array<i64: 16, 6>}, {transform_indices = @transform_1, window_bounds = array<i64: 16, 2>}, {pipeline_mode = #tpu.pipeline_mode<synchronous>, transform_indices = @transform_2, window_bounds = array<i64: 6, 128>}, {pipeline_mode = #tpu.pipeline_mode<synchronous>, transform_indices = @transform_3, window_bounds = array<i64: 14, 128>}, {transform_indices = @transform_4, window_bounds = array<i64: 16, 128>}]} {
    %c0 = arith.constant 0 : index
    %c0_0 = arith.constant 0 : index
    %0 = vector.load %arg2[%c0, %c0_0] : memref<16x2xi32, #tpu.memory_space<vmem>>, vector<16x2xi32>
    %1 = tpu.iota {dimensions = array<i32: 1>} : vector<16x14xi32>
    %c0_i32 = arith.constant 0 : i32
    %2 = vector.broadcast %c0_i32 : i32 to vector<16x14xi32>
    %3 = arith.cmpi eq, %1, %2 : vector<16x14xi32>
    %4 = vector.extract_strided_slice %0 {offsets = [0, 0], sizes = [16, 1], strides = [1, 1]} : vector<16x2xi32> to vector<16x1xi32>
    %c0_i32_1 = arith.constant 0 : i32
    %5 = vector.broadcast %c0_i32_1 : i32 to vector<16x1xi32>
    %6 = arith.cmpi sge, %4, %5 : vector<16x1xi32>
    %c4_i32 = arith.constant 4 : i32
    %7 = vector.broadcast %c4_i32 : i32 to vector<16x1xi32>
    %8 = arith.cmpi slt, %4, %7 : vector<16x1xi32>
    %9 = arith.andi %6, %8 : vector<16x1xi1>
    %c1_i32 = arith.constant 1 : i32
    %10 = vector.broadcast %c1_i32 : i32 to vector<16x1xi32>
    %11 = arith.addi %4, %10 : vector<16x1xi32>
    %12 = vector.broadcast %11 : vector<16x1xi32> to vector<16x14xi32>
    %13 = arith.cmpi eq, %1, %12 : vector<16x14xi32>
    %14 = vector.broadcast %9 : vector<16x1xi1> to vector<16x14xi1>
    %15 = arith.andi %13, %14 : vector<16x14xi1>
    %16 = arith.ori %3, %15 : vector<16x14xi1>
    %17 = vector.extract_strided_slice %0 {offsets = [0, 1], sizes = [16, 1], strides = [1, 1]} : vector<16x2xi32> to vector<16x1xi32>
    %c0_i32_2 = arith.constant 0 : i32
    %18 = vector.broadcast %c0_i32_2 : i32 to vector<16x1xi32>
    %19 = arith.cmpi sge, %17, %18 : vector<16x1xi32>
    %c9_i32 = arith.constant 9 : i32
    %20 = vector.broadcast %c9_i32 : i32 to vector<16x1xi32>
    %21 = arith.cmpi slt, %17, %20 : vector<16x1xi32>
    %22 = arith.andi %19, %21 : vector<16x1xi1>
    %c5_i32 = arith.constant 5 : i32
    %23 = vector.broadcast %c5_i32 : i32 to vector<16x1xi32>
    %24 = arith.addi %17, %23 : vector<16x1xi32>
    %25 = vector.broadcast %24 : vector<16x1xi32> to vector<16x14xi32>
    %26 = arith.cmpi eq, %1, %25 : vector<16x14xi32>
    %27 = vector.broadcast %22 : vector<16x1xi1> to vector<16x14xi1>
    %28 = arith.andi %26, %27 : vector<16x14xi1>
    %29 = arith.ori %16, %28 : vector<16x14xi1>
    %30 = arith.extui %29 : vector<16x14xi1> to vector<16x14xi32>
    %31 = arith.sitofp %30 : vector<16x14xi32> to vector<16x14xf32>
    %32 = arith.truncf %31 : vector<16x14xf32> to vector<16x14xbf16>
    %c0_3 = arith.constant 0 : index
    %c0_4 = arith.constant 0 : index
    %33 = vector.load %arg4[%c0_3, %c0_4] : memref<14x128xbf16, #tpu.memory_space<vmem>>, vector<14x128xbf16>
    %cst = arith.constant dense<0.000000e+00> : vector<16x128xf32>
    %34 = tpu.matmul %32, %33, %cst {dimension_numbers = #tpu.dot_dimension_numbers<[1], [0], [0], [1], [0, 0, 1, 1], [], []>} : vector<16x14xbf16>, vector<14x128xbf16>, vector<16x128xf32> -> vector<16x128xf32>
    %c0_5 = arith.constant 0 : index
    %c0_6 = arith.constant 0 : index
    %35 = vector.load %arg1[%c0_5, %c0_6] : memref<16x6xbf16, #tpu.memory_space<vmem>>, vector<16x6xbf16>
    %c0_7 = arith.constant 0 : index
    %c0_8 = arith.constant 0 : index
    %36 = vector.load %arg3[%c0_7, %c0_8] : memref<6x128xbf16, #tpu.memory_space<vmem>>, vector<6x128xbf16>
    %cst_9 = arith.constant dense<0.000000e+00> : vector<16x128xf32>
    %37 = tpu.matmul %35, %36, %cst_9 {dimension_numbers = #tpu.dot_dimension_numbers<[1], [0], [0], [1], [0, 0, 1, 1], [], []>} : vector<16x6xbf16>, vector<6x128xbf16>, vector<16x128xf32> -> vector<16x128xf32>
    %38 = arith.addf %34, %37 : vector<16x128xf32>
    %c0_10 = arith.constant 0 : index
    %c0_11 = arith.constant 0 : index
    %39 = vector.load %arg5[%c0_10, %c0_11] : memref<16x128xf32, #tpu.memory_space<vmem>>, vector<16x128xf32>
    tpu.vector_store %arg5[%c0_10, %c0_11], %38 {strides = array<i32>} : memref<16x128xf32, #tpu.memory_space<vmem>>, vector<16x128xf32>,
    return
  }
  func.func @transform_0(%arg0: i32) -> (i32, i32) {
    %c0_i32 = arith.constant 0 : i32
    %c0_i32_0 = arith.constant 0 : i32
    return %arg0, %c0_i32 : i32, i32
  }
  func.func @transform_1(%arg0: i32) -> (i32, i32) {
    %c0_i32 = arith.constant 0 : i32
    %c0_i32_0 = arith.constant 0 : i32
    return %arg0, %c0_i32 : i32, i32
  }
  func.func @transform_2(%arg0: i32) -> (i32, i32) {
    %c0_i32 = arith.constant 0 : i32
    %c0_i32_0 = arith.constant 0 : i32
    %c0_i32_1 = arith.constant 0 : i32
    return %c0_i32, %c0_i32_0 : i32, i32
  }
  func.func @transform_3(%arg0: i32) -> (i32, i32) {
    %c0_i32 = arith.constant 0 : i32
    %c0_i32_0 = arith.constant 0 : i32
    %c0_i32_1 = arith.constant 0 : i32
    return %c0_i32, %c0_i32_0 : i32, i32
  }
  func.func @transform_4(%arg0: i32) -> (i32, i32) {
    %c0_i32 = arith.constant 0 : i32
    %c0_i32_0 = arith.constant 0 : i32
    return %arg0, %c0_i32 : i32, i32
  }
}

module attributes {stable_mosaic.version = 11 : i64} {
  func.func @kernel(%arg0: i32, %arg1: memref<8x3xi32, #tpu.memory_space<vmem>>, %arg2: memref<20x128xbf16, #tpu.memory_space<vmem>>, %arg3: memref<8x128xf32, #tpu.memory_space<vmem>>) attributes {dimension_semantics = [#tpu.dimension_semantics<parallel>], iteration_bounds = array<i64: 1>, scalar_prefetch = 0 : i64, scratch_operands = 0 : i64, tpu.core_type = #tpu.core_type<tc>, window_params = [{transform_indices = @transform_0, window_bounds = array<i64: 8, 3>}, {pipeline_mode = #tpu.pipeline_mode<synchronous>, transform_indices = @transform_1, window_bounds = array<i64: 20, 128>}, {transform_indices = @transform_2, window_bounds = array<i64: 8, 128>}]} {
    %c0 = arith.constant 0 : index
    %c0_0 = arith.constant 0 : index
    %0 = vector.load %arg1[%c0, %c0_0] : memref<8x3xi32, #tpu.memory_space<vmem>>, vector<8x3xi32>
    %1 = tpu.iota {dimensions = array<i32: 1>} : vector<8x20xi32>
    %2 = vector.extract_strided_slice %0 {offsets = [0, 0], sizes = [8, 1], strides = [1, 1]} : vector<8x3xi32> to vector<8x1xi32>
    %c0_i32 = arith.constant 0 : i32
    %3 = vector.broadcast %c0_i32 : i32 to vector<8x1xi32>
    %4 = arith.cmpi sge, %2, %3 : vector<8x1xi32>
    %c11_i32 = arith.constant 11 : i32
    %5 = vector.broadcast %c11_i32 : i32 to vector<8x1xi32>
    %6 = arith.cmpi slt, %2, %5 : vector<8x1xi32>
    %7 = arith.andi %4, %6 : vector<8x1xi1>
    %c0_i32_1 = arith.constant 0 : i32
    %8 = vector.broadcast %c0_i32_1 : i32 to vector<8x1xi32>
    %9 = arith.addi %2, %8 : vector<8x1xi32>
    %10 = vector.broadcast %9 : vector<8x1xi32> to vector<8x20xi32>
    %11 = arith.cmpi eq, %1, %10 : vector<8x20xi32>
    %12 = vector.broadcast %7 : vector<8x1xi1> to vector<8x20xi1>
    %13 = arith.andi %11, %12 : vector<8x20xi1>
    %14 = vector.extract_strided_slice %0 {offsets = [0, 1], sizes = [8, 1], strides = [1, 1]} : vector<8x3xi32> to vector<8x1xi32>
    %c0_i32_2 = arith.constant 0 : i32
    %15 = vector.broadcast %c0_i32_2 : i32 to vector<8x1xi32>
    %16 = arith.cmpi sge, %14, %15 : vector<8x1xi32>
    %c3_i32 = arith.constant 3 : i32
    %17 = vector.broadcast %c3_i32 : i32 to vector<8x1xi32>
    %18 = arith.cmpi slt, %14, %17 : vector<8x1xi32>
    %19 = arith.andi %16, %18 : vector<8x1xi1>
    %c11_i32_3 = arith.constant 11 : i32
    %20 = vector.broadcast %c11_i32_3 : i32 to vector<8x1xi32>
    %21 = arith.addi %14, %20 : vector<8x1xi32>
    %22 = vector.broadcast %21 : vector<8x1xi32> to vector<8x20xi32>
    %23 = arith.cmpi eq, %1, %22 : vector<8x20xi32>
    %24 = vector.broadcast %19 : vector<8x1xi1> to vector<8x20xi1>
    %25 = arith.andi %23, %24 : vector<8x20xi1>
    %26 = arith.ori %13, %25 : vector<8x20xi1>
    %27 = vector.extract_strided_slice %0 {offsets = [0, 2], sizes = [8, 1], strides = [1, 1]} : vector<8x3xi32> to vector<8x1xi32>
    %c0_i32_4 = arith.constant 0 : i32
    %28 = vector.broadcast %c0_i32_4 : i32 to vector<8x1xi32>
    %29 = arith.cmpi sge, %27, %28 : vector<8x1xi32>
    %c6_i32 = arith.constant 6 : i32
    %30 = vector.broadcast %c6_i32 : i32 to vector<8x1xi32>
    %31 = arith.cmpi slt, %27, %30 : vector<8x1xi32>
    %32 = arith.andi %29, %31 : vector<8x1xi1>
    %c14_i32 = arith.constant 14 : i32
    %33 = vector.broadcast %c14_i32 : i32 to vector<8x1xi32>
    %34 = arith.addi %27, %33 : vector<8x1xi32>
    %35 = vector.broadcast %34 : vector<8x1xi32> to vector<8x20xi32>
    %36 = arith.cmpi eq, %1, %35 : vector<8x20xi32>
    %37 = vector.broadcast %32 : vector<8x1xi1> to vector<8x20xi1>
    %38 = arith.andi %36, %37 : vector<8x20xi1>
    %39 = arith.ori %26, %38 : vector<8x20xi1>
    %40 = arith.extui %39 : vector<8x20xi1> to vector<8x20xi32>
    %41 = arith.sitofp %40 : vector<8x20xi32> to vector<8x20xf32>
    %42 = arith.truncf %41 : vector<8x20xf32> to vector<8x20xbf16>
    %c0_5 = arith.constant 0 : index
    %c0_6 = arith.constant 0 : index
    %43 = vector.load %arg2[%c0_5, %c0_6] : memref<20x128xbf16, #tpu.memory_space<vmem>>, vector<20x128xbf16>
    %cst = arith.constant dense<0.000000e+00> : vector<8x128xf32>
    %44 = tpu.matmul %42, %43, %cst {dimension_numbers = #tpu.dot_dimension_numbers<[1], [0], [0], [1], [0, 0, 1, 1], [], []>} : vector<8x20xbf16>, vector<20x128xbf16>, vector<8x128xf32> -> vector<8x128xf32>
    %c0_7 = arith.constant 0 : index
    %c0_8 = arith.constant 0 : index
    %45 = vector.load %arg3[%c0_7, %c0_8] : memref<8x128xf32, #tpu.memory_space<vmem>>, vector<8x128xf32>
    tpu.vector_store %arg3[%c0_7, %c0_8], %44 {strides = array<i32>} : memref<8x128xf32, #tpu.memory_space<vmem>>, vector<8x128xf32>,
    return
  }
  func.func @transform_0(%arg0: i32) -> (i32, i32) {
    %c0_i32 = arith.constant 0 : i32
    %c0_i32_0 = arith.constant 0 : i32
    return %arg0, %c0_i32 : i32, i32
  }
  func.func @transform_1(%arg0: i32) -> (i32, i32) {
    %c0_i32 = arith.constant 0 : i32
    %c0_i32_0 = arith.constant 0 : i32
    %c0_i32_1 = arith.constant 0 : i32
    return %c0_i32, %c0_i32_0 : i32, i32
  }
  func.func @transform_2(%arg0: i32) -> (i32, i32) {
    %c0_i32 = arith.constant 0 : i32
    %c0_i32_0 = arith.constant 0 : i32
    return %arg0, %c0_i32 : i32, i32
  }
}

module attributes {stable_mosaic.version = 11 : i64} {
  func.func @kernel(%arg0: i32, %arg1: memref<2x3xbf16, #tpu.memory_space<vmem>>, %arg2: memref<2x2xi32, #tpu.memory_space<vmem>>, %arg3: memref<3x128xbf16, #tpu.memory_space<vmem>>, %arg4: memref<13x128xbf16, #tpu.memory_space<vmem>>, %arg5: memref<2x128xf32, #tpu.memory_space<vmem>>) attributes {dimension_semantics = [#tpu.dimension_semantics<parallel>], iteration_bounds = array<i64: 1>, scalar_prefetch = 0 : i64, scratch_operands = 0 : i64, tpu.core_type = #tpu.core_type<tc>, window_params = [{transform_indices = @transform_0, window_bounds = array<i64: 2, 3>}, {transform_indices = @transform_1, window_bounds = array<i64: 2, 2>}, {pipeline_mode = #tpu.pipeline_mode<synchronous>, transform_indices = @transform_2, window_bounds = array<i64: 3, 128>}, {pipeline_mode = #tpu.pipeline_mode<synchronous>, transform_indices = @transform_3, window_bounds = array<i64: 13, 128>}, {transform_indices = @transform_4, window_bounds = array<i64: 2, 128>}]} {
    %c0 = arith.constant 0 : index
    %c0_0 = arith.constant 0 : index
    %0 = vector.load %arg2[%c0, %c0_0] : memref<2x2xi32, #tpu.memory_space<vmem>>, vector<2x2xi32>
    %1 = tpu.iota {dimensions = array<i32: 1>} : vector<2x13xi32>
    %c0_i32 = arith.constant 0 : i32
    %2 = vector.broadcast %c0_i32 : i32 to vector<2x13xi32>
    %3 = arith.cmpi eq, %1, %2 : vector<2x13xi32>
    %4 = vector.extract_strided_slice %0 {offsets = [0, 0], sizes = [2, 1], strides = [1, 1]} : vector<2x2xi32> to vector<2x1xi32>
    %c0_i32_1 = arith.constant 0 : i32
    %5 = vector.broadcast %c0_i32_1 : i32 to vector<2x1xi32>
    %6 = arith.cmpi sge, %4, %5 : vector<2x1xi32>
    %c5_i32 = arith.constant 5 : i32
    %7 = vector.broadcast %c5_i32 : i32 to vector<2x1xi32>
    %8 = arith.cmpi slt, %4, %7 : vector<2x1xi32>
    %9 = arith.andi %6, %8 : vector<2x1xi1>
    %c1_i32 = arith.constant 1 : i32
    %10 = vector.broadcast %c1_i32 : i32 to vector<2x1xi32>
    %11 = arith.addi %4, %10 : vector<2x1xi32>
    %12 = vector.broadcast %11 : vector<2x1xi32> to vector<2x13xi32>
    %13 = arith.cmpi eq, %1, %12 : vector<2x13xi32>
    %14 = vector.broadcast %9 : vector<2x1xi1> to vector<2x13xi1>
    %15 = arith.andi %13, %14 : vector<2x13xi1>
    %16 = arith.ori %3, %15 : vector<2x13xi1>
    %17 = vector.extract_strided_slice %0 {offsets = [0, 1], sizes = [2, 1], strides = [1, 1]} : vector<2x2xi32> to vector<2x1xi32>
    %c0_i32_2 = arith.constant 0 : i32
    %18 = vector.broadcast %c0_i32_2 : i32 to vector<2x1xi32>
    %19 = arith.cmpi sge, %17, %18 : vector<2x1xi32>
    %c7_i32 = arith.constant 7 : i32
    %20 = vector.broadcast %c7_i32 : i32 to vector<2x1xi32>
    %21 = arith.cmpi slt, %17, %20 : vector<2x1xi32>
    %22 = arith.andi %19, %21 : vector<2x1xi1>
    %c6_i32 = arith.constant 6 : i32
    %23 = vector.broadcast %c6_i32 : i32 to vector<2x1xi32>
    %24 = arith.addi %17, %23 : vector<2x1xi32>
    %25 = vector.broadcast %24 : vector<2x1xi32> to vector<2x13xi32>
    %26 = arith.cmpi eq, %1, %25 : vector<2x13xi32>
    %27 = vector.broadcast %22 : vector<2x1xi1> to vector<2x13xi1>
    %28 = arith.andi %26, %27 : vector<2x13xi1>
    %29 = arith.ori %16, %28 : vector<2x13xi1>
    %30 = arith.extui %29 : vector<2x13xi1> to vector<2x13xi32>
    %31 = arith.sitofp %30 : vector<2x13xi32> to vector<2x13xf32>
    %32 = arith.truncf %31 : vector<2x13xf32> to vector<2x13xbf16>
    %c0_3 = arith.constant 0 : index
    %c0_4 = arith.constant 0 : index
    %33 = vector.load %arg4[%c0_3, %c0_4] : memref<13x128xbf16, #tpu.memory_space<vmem>>, vector<13x128xbf16>
    %cst = arith.constant dense<0.000000e+00> : vector<2x128xf32>
    %34 = tpu.matmul %32, %33, %cst {dimension_numbers = #tpu.dot_dimension_numbers<[1], [0], [0], [1], [0, 0, 1, 1], [], []>} : vector<2x13xbf16>, vector<13x128xbf16>, vector<2x128xf32> -> vector<2x128xf32>
    %c0_5 = arith.constant 0 : index
    %c0_6 = arith.constant 0 : index
    %35 = vector.load %arg1[%c0_5, %c0_6] : memref<2x3xbf16, #tpu.memory_space<vmem>>, vector<2x3xbf16>
    %c0_7 = arith.constant 0 : index
    %c0_8 = arith.constant 0 : index
    %36 = vector.load %arg3[%c0_7, %c0_8] : memref<3x128xbf16, #tpu.memory_space<vmem>>, vector<3x128xbf16>
    %cst_9 = arith.constant dense<0.000000e+00> : vector<2x128xf32>
    %37 = tpu.matmul %35, %36, %cst_9 {dimension_numbers = #tpu.dot_dimension_numbers<[1], [0], [0], [1], [0, 0, 1, 1], [], []>} : vector<2x3xbf16>, vector<3x128xbf16>, vector<2x128xf32> -> vector<2x128xf32>
    %38 = arith.addf %34, %37 : vector<2x128xf32>
    %c0_10 = arith.constant 0 : index
    %c0_11 = arith.constant 0 : index
    %39 = vector.load %arg5[%c0_10, %c0_11] : memref<2x128xf32, #tpu.memory_space<vmem>>, vector<2x128xf32>
    tpu.vector_store %arg5[%c0_10, %c0_11], %38 {strides = array<i32>} : memref<2x128xf32, #tpu.memory_space<vmem>>, vector<2x128xf32>,
    return
  }
  func.func @transform_0(%arg0: i32) -> (i32, i32) {
    %c0_i32 = arith.constant 0 : i32
    %c0_i32_0 = arith.constant 0 : i32
    return %arg0, %c0_i32 : i32, i32
  }
  func.func @transform_1(%arg0: i32) -> (i32, i32) {
    %c0_i32 = arith.constant 0 : i32
    %c0_i32_0 = arith.constant 0 : i32
    return %arg0, %c0_i32 : i32, i32
  }
  func.func @transform_2(%arg0: i32) -> (i32, i32) {
    %c0_i32 = arith.constant 0 : i32
    %c0_i32_0 = arith.constant 0 : i32
    %c0_i32_1 = arith.constant 0 : i32
    return %c0_i32, %c0_i32_0 : i32, i32
  }
  func.func @transform_3(%arg0: i32) -> (i32, i32) {
    %c0_i32 = arith.constant 0 : i32
    %c0_i32_0 = arith.constant 0 : i32
    %c0_i32_1 = arith.constant 0 : i32
    return %c0_i32, %c0_i32_0 : i32, i32
  }
  func.func @transform_4(%arg0: i32) -> (i32, i32) {
    %c0_i32 = arith.constant 0 : i32
    %c0_i32_0 = arith.constant 0 : i32
    return %arg0, %c0_i32 : i32, i32
  }
}

</mosaic_0001>

<llo_original>
// kernel: _forward_impl.4
$region0: #{_forward_impl.4}
  #allocation0 [shape = 'u32[]', space=smem, size = 0x4, offset = 0x4, fixed_abs, tag = 'smem constant byte address 0x4 - core index']
  #allocation1 [shape = 'u32[144,128]{1,0:T(1,128)}', space=vmem, size = 0x12000, scoped, tag = 'internal scratch']
  %s0 = inlined_call_operand.vmem [shape: bf16[16,6], index: 0, kind: input, shape index: {}]
  %s1 = inlined_call_operand.vmem [shape: s32[16,2], index: 1, kind: input, shape index: {}]
  %s2 = inlined_call_operand.vmem [shape: bf16[6,128], index: 2, kind: input, shape index: {}]
  %s3 = inlined_call_operand.vmem [shape: bf16[14,128], index: 3, kind: input, shape index: {}]
  %s4 = inlined_call_operand.vmem [shape: f32[16,128], index: 4, kind: output, shape index: {}]
  %s5 = sld [smem:[#allocation0]]
  $region26: #{_forward_impl.4} parent=0
    _
  %s7 = ssub.s32 1, %s5
  %s8 = scalar_select 0, %s7, %s5
  // Predicated region
  $region2: #{_forward_impl.4} parent=0 // pred_check
    _
  $region3: #{_forward_impl.4} parent=0 // pred_check_branch
    %10 = sbr.rel (0) target = $region5
  $region4: #{_forward_impl.4} parent=0 // pred_region
    _
  $region5: #{_forward_impl.4} parent=0 // pred_fallthru
    _
  // Predicated region
  $region6: #{_forward_impl.4} parent=0 // pred_check
    _
  $region7: #{_forward_impl.4} parent=0 // pred_check_branch
    %12 = sbr.rel (0) target = $region9
  $region8: #{_forward_impl.4} parent=0 // pred_region
    _
  $region9: #{_forward_impl.4} parent=0 // pred_fallthru
    _
  // Predicated region
  $region10: #{_forward_impl.4} parent=0 // pred_check
    _
  $region11: #{_forward_impl.4} parent=0 // pred_check_branch
    %14 = sbr.rel (0) target = $region13
  $region12: #{_forward_impl.4} parent=0 // pred_region
    _
  $region13: #{_forward_impl.4} parent=0 // pred_fallthru
    _
  // Predicated region
  $region14: #{_forward_impl.4} parent=0 // pred_check
    _
  $region15: #{_forward_impl.4} parent=0 // pred_check_branch
    %16 = sbr.rel (0) target = $region17
  $region16: #{_forward_impl.4} parent=0 // pred_region
    _
  $region17: #{_forward_impl.4} parent=0 // pred_fallthru
    _
  %v18 = vld [vmem:[%s1] sm:$0xff]
  %v19 = vld [vmem:[%s1 + $0x8] sm:$0xff]
  %v20 = vlaneseq
  %v21 = vand.u32 %v20, 127
  %vm22 = vcmp.eq.s32.totalorder %v21, 0
  %vm23 = vcmp.ge.s32.totalorder %v18, 0
  %vm24 = vcmp.ge.s32.totalorder %v19, 0
  %vm25 = vcmp.lt.s32.totalorder %v18, 4
  %vm26 = vcmp.lt.s32.totalorder %v19, 4
  %vm27 = vmand %vm23, %vm25
  %vm28 = vmand %vm24, %vm26
  %v29 = vadd.s32 %v18, 1
  %v30 = vadd.s32 %v19, 1
  %31 = vset.pattern.permute.xlu0 0
  %32 = vperm.xlu0 %31, %v29
  %v33 = vpop.permute.xlu0 %32
  %34 = vset.pattern.permute.xlu0 0
  %35 = vperm.xlu0 %34, %v30
  %v36 = vpop.permute.xlu0 %35
  %vm37 = vcmp.eq.s32.totalorder %v21, %v33
  %vm38 = vcmp.eq.s32.totalorder %v21, %v36
  %v39 = vsel %vm27, 1, 0
  %v40 = vsel %vm28, 1, 0
  %41 = vset.pattern.permute.xlu0 0
  %42 = vperm.xlu0 %41, %v39
  %v43 = vpop.permute.xlu0 %42
  %44 = vset.pattern.permute.xlu0 0
  %45 = vperm.xlu0 %44, %v40
  %v46 = vpop.permute.xlu0 %45
  %vm47 = vcmp.eq.s32.totalorder %v43, 1
  %vm48 = vcmp.eq.s32.totalorder %v46, 1
  %vm49 = vmand %vm37, %vm47
  %vm50 = vmand %vm38, %vm48
  %vm51 = vmor %vm22, %vm49
  %vm52 = vmor %vm22, %vm50
  %vm53 = vcmp.lt.s32.totalorder %v18, 9
  %vm54 = vcmp.lt.s32.totalorder %v19, 9
  %vm55 = vmand %vm23, %vm53
  %vm56 = vmand %vm24, %vm54
  %v57 = vadd.s32 %v18, 5
  %v58 = vadd.s32 %v19, 5
  %59 = vset.pattern.permute.xlu0 1
  %60 = vperm.xlu0 %59, %v57
  %v61 = vpop.permute.xlu0 %60
  %62 = vset.pattern.permute.xlu0 1
  %63 = vperm.xlu0 %62, %v58
  %v64 = vpop.permute.xlu0 %63
  %vm65 = vcmp.eq.s32.totalorder %v21, %v61
  %vm66 = vcmp.eq.s32.totalorder %v21, %v64
  %v67 = vsel %vm55, 1, 0
  %v68 = vsel %vm56, 1, 0
  %69 = vset.pattern.permute.xlu0 1
  %70 = vperm.xlu0 %69, %v67
  %v71 = vpop.permute.xlu0 %70
  %72 = vset.pattern.permute.xlu0 1
  %73 = vperm.xlu0 %72, %v68
  %v74 = vpop.permute.xlu0 %73
  %vm75 = vcmp.eq.s32.totalorder %v71, 1
  %vm76 = vcmp.eq.s32.totalorder %v74, 1
  %vm77 = vmand %vm65, %vm75
  %vm78 = vmand %vm66, %vm76
  %vm79 = vmor %vm51, %vm77
  %vm80 = vmor %vm52, %vm78
  %v81 = vsel %vm79, 1, 0
  %v82 = vsel %vm80, 1, 0
  %v83 = vcvt.s32.f32 %v81
  %v84 = vcvt.s32.f32 %v82
  %v85 = vpack.c.bf16 %v84, %v83
  %v86 = vld [vmem:[%s3] sm:$0xf]
  %v87 = vld [vmem:[%s3 + $0x4] sm:$0x7]
  %v88 = vld [vmem:[%s0] sm:$0xf]
  %v89 = vld [vmem:[%s0 + $0x4] sm:$0xf]
  %v90 = vld [vmem:[%s2] sm:$0x7]
  %v93 = vunpack.c.l.b16 %v88
  %v94 = vunpack.c.l.b16 %v89
  %v95 = vpack.c.b16 %v94, %v93
  %vm96 = vcmask 48128
  %v98 = vsel %vm96, %v95, 0
  %vm100 = vcmask 1042432
  %v102 = vsel %vm100, %v90, 0
  %104 = vmatprep.subr.bf16.mxu0 0
  %105 = vmatpush1.bf16.msra.mxu0 0
  %106 = vmatprep.subr.bf16.mxu0 0
  %107 = vmatpush1.bf16.msra.mxu0 0
  %108 = vmatprep.subr.bf16.mxu0 0
  %109 = vmatpush1.bf16.msra.mxu0 0
  %110 = vmatprep.subr.bf16.mxu0 0
  %111 = vmatpush1.bf16.msra.mxu0 0
  %112 = vmatprep.subr.bf16.mxu0 0
  %113 = vmatpush1.bf16.msra.mxu0 0
  %114 = vmatprep.subr.bf16.mxu0 0
  %115 = vmatpush1.bf16.msra.mxu0 0
  %116 = vmatprep.subr.bf16.mxu0 0
  %117 = vmatpush1.bf16.msra.mxu0 0
  %118 = vmatprep.subr.bf16.mxu0 0
  %119 = vmatpush1.bf16.msra.mxu0 %v102
  %120 = vmatprep.subr.bf16.mxu0 0
  %121 = vmatpush2.bf16.msra.mxu0 0
  %122 = vmatprep.subr.bf16.mxu0 0
  %123 = vmatpush2.bf16.msra.mxu0 0
  %124 = vmatprep.subr.bf16.mxu0 0
  %125 = vmatpush2.bf16.msra.mxu0 0
  %126 = vmatprep.subr.bf16.mxu0 0
  %127 = vmatpush2.bf16.msra.mxu0 0
  %128 = vmatprep.subr.bf16.mxu0 0
  %129 = vmatpush2.bf16.msra.mxu0 0
  %130 = vmatprep.subr.bf16.mxu0 0
  %131 = vmatpush2.bf16.msra.mxu0 0
  %132 = vmatprep.subr.bf16.mxu0 0
  %133 = vmatpush2.bf16.msra.mxu0 0
  %134 = vmatprep.subr.bf16.mxu0 0
  %135 = vmatpush2.bf16.msra.mxu0 0
  %136 = vmatprep.mubr.bf16.mxu0 0
  %137 = vmatmul.mubr.bf16.gmra.mxu0 %v98
  %v138 = vpop.f32.mrf.mxu0
  %v139 = vadd.f32 0.0, %v138
  %v140 = vpop.f32.mrf.mxu0
  %v141 = vpop.f32.mrf.mxu0
  %v142 = vadd.f32 0.0, %v141
  %v143 = vpop.f32.mrf.mxu0
  %144 = vdwg.mxu0
  %v147 = vunpack.c.l.b16 %v86
  %v148 = vunpack.c.l.b16 %v87
  %v149 = vpack.c.b16 %v148, %v147
  %vm150 = vcmask 113664
  %v152 = vsel %vm150, %v85, 0
  %vm154 = vcmask 1046528
  %v156 = vsel %vm154, %v149, 0
  %158 = vmatprep.subr.bf16.mxu0 0
  %159 = vmatpush1.bf16.msra.mxu0 0
  %160 = vmatprep.subr.bf16.mxu0 0
  %161 = vmatpush1.bf16.msra.mxu0 0
  %162 = vmatprep.subr.bf16.mxu0 0
  %163 = vmatpush1.bf16.msra.mxu0 0
  %164 = vmatprep.subr.bf16.mxu0 0
  %165 = vmatpush1.bf16.msra.mxu0 0
  %166 = vmatprep.subr.bf16.mxu0 0
  %167 = vmatpush1.bf16.msra.mxu0 0
  %168 = vmatprep.subr.bf16.mxu0 0
  %169 = vmatpush1.bf16.msra.mxu0 0
  %170 = vmatprep.subr.bf16.mxu0 0
  %171 = vmatpush1.bf16.msra.mxu0 0
  %172 = vmatprep.subr.bf16.mxu0 0
  %173 = vmatpush1.bf16.msra.mxu0 %v156
  %174 = vmatprep.subr.bf16.mxu0 0
  %175 = vmatpush2.bf16.msra.mxu0 0
  %176 = vmatprep.subr.bf16.mxu0 0
  %177 = vmatpush2.bf16.msra.mxu0 0
  %178 = vmatprep.subr.bf16.mxu0 0
  %179 = vmatpush2.bf16.msra.mxu0 0
  %180 = vmatprep.subr.bf16.mxu0 0
  %181 = vmatpush2.bf16.msra.mxu0 0
  %182 = vmatprep.subr.bf16.mxu0 0
  %183 = vmatpush2.bf16.msra.mxu0 0
  %184 = vmatprep.subr.bf16.mxu0 0
  %185 = vmatpush2.bf16.msra.mxu0 0
  %186 = vmatprep.subr.bf16.mxu0 0
  %187 = vmatpush2.bf16.msra.mxu0 0
  %188 = vmatprep.subr.bf16.mxu0 0
  %189 = vmatpush2.bf16.msra.mxu0 0
  %190 = vmatprep.mubr.bf16.mxu0 0
  %191 = vmatmul.mubr.bf16.gmra.mxu0 %v152
  %v192 = vpop.f32.mrf.mxu0
  %v193 = vadd.f32 %v139, %v192
  %v194 = vpop.f32.mrf.mxu0
  %v195 = vpop.f32.mrf.mxu0
  %v196 = vadd.f32 %v142, %v195
  %v197 = vpop.f32.mrf.mxu0
  %198 = vdwg.mxu0
  %199 = vst [vmem:[%s4] sm:$0xff] %v193
  %200 = vst [vmem:[%s4 + $0x8] sm:$0xff] %v196
  // Predicated region
  $region18: #{_forward_impl.4} parent=0 // pred_check
    _
  $region19: #{_forward_impl.4} parent=0 // pred_check_branch
    %202 = sbr.rel (0) target = $region21
  $region20: #{_forward_impl.4} parent=0 // pred_region
    _
  $region21: #{_forward_impl.4} parent=0 // pred_fallthru
    _
  // Predicated region
  $region22: #{_forward_impl.4} parent=0 // pred_check
    _
  $region23: #{_forward_impl.4} parent=0 // pred_check_branch
    %204 = sbr.rel (0) target = $region25
  $region24: #{_forward_impl.4} parent=0 // pred_region
    _
  $region25: #{_forward_impl.4} parent=0 // pred_fallthru
    _

// kernel: _forward_impl.5
$region0: #{_forward_impl.5}
  #allocation0 [shape = 'u32[]', space=smem, size = 0x4, offset = 0x4, fixed_abs, tag = 'smem constant byte address 0x4 - core index']
  #allocation1 [shape = 'u32[144,128]{1,0:T(1,128)}', space=vmem, size = 0x12000, scoped, tag = 'internal scratch']
  %s0 = inlined_call_operand.vmem [shape: s32[8,3], index: 0, kind: input, shape index: {}]
  %s1 = inlined_call_operand.vmem [shape: bf16[20,128], index: 1, kind: input, shape index: {}]
  %s2 = inlined_call_operand.vmem [shape: f32[8,128], index: 2, kind: output, shape index: {}]
  %s3 = sld [smem:[#allocation0]]
  $region18: #{_forward_impl.5} parent=0
    _
  %s5 = ssub.s32 1, %s3
  %s6 = scalar_select 0, %s5, %s3
  // Predicated region
  $region2: #{_forward_impl.5} parent=0 // pred_check
    _
  $region3: #{_forward_impl.5} parent=0 // pred_check_branch
    %8 = sbr.rel (0) target = $region5
  $region4: #{_forward_impl.5} parent=0 // pred_region
    _
  $region5: #{_forward_impl.5} parent=0 // pred_fallthru
    _
  // Predicated region
  $region6: #{_forward_impl.5} parent=0 // pred_check
    _
  $region7: #{_forward_impl.5} parent=0 // pred_check_branch
    %10 = sbr.rel (0) target = $region9
  $region8: #{_forward_impl.5} parent=0 // pred_region
    _
  $region9: #{_forward_impl.5} parent=0 // pred_fallthru
    _
  %v12 = vld [vmem:[%s0] sm:$0xff]
  %v13 = vlaneseq
  %v14 = vand.u32 %v13, 127
  %vm15 = vcmp.ge.s32.totalorder %v12, 0
  %vm16 = vcmp.lt.s32.totalorder %v12, 11
  %vm17 = vmand %vm15, %vm16
  %18 = vset.pattern.permute.xlu0 0
  %19 = vperm.xlu0 %18, %v12
  %v20 = vpop.permute.xlu0 %19
  %vm21 = vcmp.eq.s32.totalorder %v14, %v20
  %v22 = vsel %vm17, 1, 0
  %23 = vset.pattern.permute.xlu0 0
  %24 = vperm.xlu0 %23, %v22
  %v25 = vpop.permute.xlu0 %24
  %vm26 = vcmp.eq.s32.totalorder %v25, 1
  %vm27 = vmand %vm21, %vm26
  %vm28 = vcmp.lt.s32.totalorder %v12, 3
  %vm29 = vmand %vm15, %vm28
  %v30 = vadd.s32 %v12, 11
  %31 = vset.pattern.permute.xlu0 1
  %32 = vperm.xlu0 %31, %v30
  %v33 = vpop.permute.xlu0 %32
  %vm34 = vcmp.eq.s32.totalorder %v14, %v33
  %v35 = vsel %vm29, 1, 0
  %36 = vset.pattern.permute.xlu0 1
  %37 = vperm.xlu0 %36, %v35
  %v38 = vpop.permute.xlu0 %37
  %vm39 = vcmp.eq.s32.totalorder %v38, 1
  %vm40 = vmand %vm34, %vm39
  %vm41 = vmor %vm27, %vm40
  %vm42 = vcmp.lt.s32.totalorder %v12, 6
  %vm43 = vmand %vm15, %vm42
  %v44 = vadd.s32 %v12, 14
  %45 = vset.pattern.permute.xlu0 2
  %46 = vperm.xlu0 %45, %v44
  %v47 = vpop.permute.xlu0 %46
  %vm48 = vcmp.eq.s32.totalorder %v14, %v47
  %v49 = vsel %vm43, 1, 0
  %50 = vset.pattern.permute.xlu0 2
  %51 = vperm.xlu0 %50, %v49
  %v52 = vpop.permute.xlu0 %51
  %vm53 = vcmp.eq.s32.totalorder %v52, 1
  %vm54 = vmand %vm48, %vm53
  %vm55 = vmor %vm41, %vm54
  %v56 = vsel %vm55, 1, 0
  %v57 = vcvt.s32.f32 %v56
  %v58 = vpack.c.bf16 %v57, %v57
  %v59 = vld [vmem:[%s1] sm:$0xf]
  %v60 = vld [vmem:[%s1 + $0x4] sm:$0xf]
  %v61 = vld [vmem:[%s1 + $0x8] sm:$0x3]
  %v65 = vunpack.c.l.b16 %v59
  %v66 = vunpack.c.l.b16 %v60
  %v67 = vunpack.c.l.b16 %v61
  %v68 = vpack.c.b16 %v66, %v65
  %v69 = vpack.c.b16 %v67, %v67
  %vm71 = vcmask 162816
  %v73 = vsel %vm71, %v58, 0
  %vm75 = vcmask 1041408
  %v77 = vsel %vm75, %v69, 0
  %79 = vmatprep.subr.bf16.mxu0 0
  %80 = vmatpush1.bf16.msra.mxu0 0
  %81 = vmatprep.subr.bf16.mxu0 0
  %82 = vmatpush1.bf16.msra.mxu0 0
  %83 = vmatprep.subr.bf16.mxu0 0
  %84 = vmatpush1.bf16.msra.mxu0 0
  %85 = vmatprep.subr.bf16.mxu0 0
  %86 = vmatpush1.bf16.msra.mxu0 0
  %87 = vmatprep.subr.bf16.mxu0 0
  %88 = vmatpush1.bf16.msra.mxu0 0
  %89 = vmatprep.subr.bf16.mxu0 0
  %90 = vmatpush1.bf16.msra.mxu0 0
  %91 = vmatprep.subr.bf16.mxu0 0
  %92 = vmatpush1.bf16.msra.mxu0 %v77
  %93 = vmatprep.subr.bf16.mxu0 0
  %94 = vmatpush1.bf16.msra.mxu0 %v68
  %95 = vmatprep.subr.bf16.mxu0 0
  %96 = vmatpush2.bf16.msra.mxu0 0
  %97 = vmatprep.subr.bf16.mxu0 0
  %98 = vmatpush2.bf16.msra.mxu0 0
  %99 = vmatprep.subr.bf16.mxu0 0
  %100 = vmatpush2.bf16.msra.mxu0 0
  %101 = vmatprep.subr.bf16.mxu0 0
  %102 = vmatpush2.bf16.msra.mxu0 0
  %103 = vmatprep.subr.bf16.mxu0 0
  %104 = vmatpush2.bf16.msra.mxu0 0
  %105 = vmatprep.subr.bf16.mxu0 0
  %106 = vmatpush2.bf16.msra.mxu0 0
  %107 = vmatprep.subr.bf16.mxu0 0
  %108 = vmatpush2.bf16.msra.mxu0 0
  %109 = vmatprep.subr.bf16.mxu0 0
  %110 = vmatpush2.bf16.msra.mxu0 0
  %111 = vmatprep.mubr.bf16.mxu0 0
  %112 = vmatmul.mubr.bf16.gmra.mxu0 %v73
  %v113 = vpop.f32.mrf.mxu0
  %v114 = vadd.f32 0.0, %v113
  %v115 = vpop.f32.mrf.mxu0
  %v116 = vpop.f32.mrf.mxu0
  %v117 = vpop.f32.mrf.mxu0
  %118 = vdwg.mxu0
  %119 = vst [vmem:[%s2] sm:$0xff] %v114
  // Predicated region
  $region10: #{_forward_impl.5} parent=0 // pred_check
    _
  $region11: #{_forward_impl.5} parent=0 // pred_check_branch
    %121 = sbr.rel (0) target = $region13
  $region12: #{_forward_impl.5} parent=0 // pred_region
    _
  $region13: #{_forward_impl.5} parent=0 // pred_fallthru
    _
  // Predicated region
  $region14: #{_forward_impl.5} parent=0 // pred_check
    _
  $region15: #{_forward_impl.5} parent=0 // pred_check_branch
    %123 = sbr.rel (0) target = $region17
  $region16: #{_forward_impl.5} parent=0 // pred_region
    _
  $region17: #{_forward_impl.5} parent=0 // pred_fallthru
    _

// kernel: _forward_impl.3
$region0: #{_forward_impl.3}
  #allocation0 [shape = 'u32[]', space=smem, size = 0x4, offset = 0x4, fixed_abs, tag = 'smem constant byte address 0x4 - core index']
  #allocation1 [shape = 'u32[144,128]{1,0:T(1,128)}', space=vmem, size = 0x12000, scoped, tag = 'internal scratch']
  %s0 = inlined_call_operand.vmem [shape: bf16[2,3], index: 0, kind: input, shape index: {}]
  %s1 = inlined_call_operand.vmem [shape: s32[2,2], index: 1, kind: input, shape index: {}]
  %s2 = inlined_call_operand.vmem [shape: bf16[3,128], index: 2, kind: input, shape index: {}]
  %s3 = inlined_call_operand.vmem [shape: bf16[13,128], index: 3, kind: input, shape index: {}]
  %s4 = inlined_call_operand.vmem [shape: f32[2,128], index: 4, kind: output, shape index: {}]
  %s5 = sld [smem:[#allocation0]]
  $region26: #{_forward_impl.3} parent=0
    _
  %s7 = ssub.s32 1, %s5
  %s8 = scalar_select 0, %s7, %s5
  // Predicated region
  $region2: #{_forward_impl.3} parent=0 // pred_check
    _
  $region3: #{_forward_impl.3} parent=0 // pred_check_branch
    %10 = sbr.rel (0) target = $region5
  $region4: #{_forward_impl.3} parent=0 // pred_region
    _
  $region5: #{_forward_impl.3} parent=0 // pred_fallthru
    _
  // Predicated region
  $region6: #{_forward_impl.3} parent=0 // pred_check
    _
  $region7: #{_forward_impl.3} parent=0 // pred_check_branch
    %12 = sbr.rel (0) target = $region9
  $region8: #{_forward_impl.3} parent=0 // pred_region
    _
  $region9: #{_forward_impl.3} parent=0 // pred_fallthru
    _
  // Predicated region
  $region10: #{_forward_impl.3} parent=0 // pred_check
    _
  $region11: #{_forward_impl.3} parent=0 // pred_check_branch
    %14 = sbr.rel (0) target = $region13
  $region12: #{_forward_impl.3} parent=0 // pred_region
    _
  $region13: #{_forward_impl.3} parent=0 // pred_fallthru
    _
  // Predicated region
  $region14: #{_forward_impl.3} parent=0 // pred_check
    _
  $region15: #{_forward_impl.3} parent=0 // pred_check_branch
    %16 = sbr.rel (0) target = $region17
  $region16: #{_forward_impl.3} parent=0 // pred_region
    _
  $region17: #{_forward_impl.3} parent=0 // pred_fallthru
    _
  %v18 = vld [vmem:[%s1] sm:$0x3]
  %v19 = vlaneseq
  %v20 = vand.u32 %v19, 127
  %vm21 = vcmp.eq.s32.totalorder %v20, 0
  %vm22 = vcmp.ge.s32.totalorder %v18, 0
  %vm23 = vcmp.lt.s32.totalorder %v18, 5
  %vm24 = vmand %vm22, %vm23
  %v25 = vadd.s32 %v18, 1
  %26 = vset.pattern.permute.xlu0 0
  %27 = vperm.xlu0 %26, %v25
  %v28 = vpop.permute.xlu0 %27
  %vm29 = vcmp.eq.s32.totalorder %v20, %v28
  %v30 = vsel %vm24, 1, 0
  %31 = vset.pattern.permute.xlu0 0
  %32 = vperm.xlu0 %31, %v30
  %v33 = vpop.permute.xlu0 %32
  %vm34 = vcmp.eq.s32.totalorder %v33, 1
  %vm35 = vmand %vm29, %vm34
  %vm36 = vmor %vm21, %vm35
  %vm37 = vcmp.lt.s32.totalorder %v18, 7
  %vm38 = vmand %vm22, %vm37
  %v39 = vadd.s32 %v18, 6
  %40 = vset.pattern.permute.xlu0 1
  %41 = vperm.xlu0 %40, %v39
  %v42 = vpop.permute.xlu0 %41
  %vm43 = vcmp.eq.s32.totalorder %v20, %v42
  %v44 = vsel %vm38, 1, 0
  %45 = vset.pattern.permute.xlu0 1
  %46 = vperm.xlu0 %45, %v44
  %v47 = vpop.permute.xlu0 %46
  %vm48 = vcmp.eq.s32.totalorder %v47, 1
  %vm49 = vmand %vm43, %vm48
  %vm50 = vmor %vm36, %vm49
  %v51 = vsel %vm50, 1, 0
  %v52 = vcvt.s32.f32 %v51
  %v53 = vpack.c.bf16 %v52, %v52
  %v54 = vld [vmem:[%s3] sm:$0xf]
  %v55 = vld [vmem:[%s3 + $0x4] sm:$0x7]
  %v56 = vld [vmem:[%s0] sm:$0x1]
  %v57 = vld [vmem:[%s2] sm:$0x3]
  %vm58 = vcmask 23552
  %v60 = vsel %vm58, %v56, 0
  %vm62 = vcmask 1040384
  %vm63 = vcmask 1041408
  %v64 = vsel %vm62, 4294967295, 65535
  %v65 = vsel %vm63, %v64, 0
  %v67 = vand.u32 %v57, %v65
  %69 = vmatprep.subr.bf16.mxu0 0
  %70 = vmatpush1.bf16.msra.mxu0 0
  %71 = vmatprep.subr.bf16.mxu0 0
  %72 = vmatpush1.bf16.msra.mxu0 0
  %73 = vmatprep.subr.bf16.mxu0 0
  %74 = vmatpush1.bf16.msra.mxu0 0
  %75 = vmatprep.subr.bf16.mxu0 0
  %76 = vmatpush1.bf16.msra.mxu0 0
  %77 = vmatprep.subr.bf16.mxu0 0
  %78 = vmatpush1.bf16.msra.mxu0 0
  %79 = vmatprep.subr.bf16.mxu0 0
  %80 = vmatpush1.bf16.msra.mxu0 0
  %81 = vmatprep.subr.bf16.mxu0 0
  %82 = vmatpush1.bf16.msra.mxu0 0
  %83 = vmatprep.subr.bf16.mxu0 0
  %84 = vmatpush1.bf16.msra.mxu0 %v67
  %85 = vmatprep.subr.bf16.mxu0 0
  %86 = vmatpush2.bf16.msra.mxu0 0
  %87 = vmatprep.subr.bf16.mxu0 0
  %88 = vmatpush2.bf16.msra.mxu0 0
  %89 = vmatprep.subr.bf16.mxu0 0
  %90 = vmatpush2.bf16.msra.mxu0 0
  %91 = vmatprep.subr.bf16.mxu0 0
  %92 = vmatpush2.bf16.msra.mxu0 0
  %93 = vmatprep.subr.bf16.mxu0 0
  %94 = vmatpush2.bf16.msra.mxu0 0
  %95 = vmatprep.subr.bf16.mxu0 0
  %96 = vmatpush2.bf16.msra.mxu0 0
  %97 = vmatprep.subr.bf16.mxu0 0
  %98 = vmatpush2.bf16.msra.mxu0 0
  %99 = vmatprep.subr.bf16.mxu0 0
  %100 = vmatpush2.bf16.msra.mxu0 0
  %101 = vmatprep.mubr.bf16.mxu0 0
  %102 = vmatmul.mubr.bf16.gmra.mxu0 %v60
  %v103 = vpop.f32.mrf.mxu0
  %v104 = vadd.f32 0.0, %v103
  %v105 = vpop.f32.mrf.mxu0
  %v106 = vpop.f32.mrf.mxu0
  %v107 = vpop.f32.mrf.mxu0
  %108 = vdwg.mxu0
  %v111 = vunpack.c.l.b16 %v54
  %v112 = vunpack.c.l.b16 %v55
  %v113 = vpack.c.b16 %v112, %v111
  %vm114 = vcmask 105472
  %v116 = vsel %vm114, %v53, 0
  %vm118 = vcmask 1045504
  %vm119 = vcmask 1046528
  %v120 = vsel %vm118, 4294967295, 65535
  %v121 = vsel %vm119, %v120, 0
  %v123 = vand.u32 %v113, %v121
  %125 = vmatprep.subr.bf16.mxu0 0
  %126 = vmatpush1.bf16.msra.mxu0 0
  %127 = vmatprep.subr.bf16.mxu0 0
  %128 = vmatpush1.bf16.msra.mxu0 0
  %129 = vmatprep.subr.bf16.mxu0 0
  %130 = vmatpush1.bf16.msra.mxu0 0
  %131 = vmatprep.subr.bf16.mxu0 0
  %132 = vmatpush1.bf16.msra.mxu0 0
  %133 = vmatprep.subr.bf16.mxu0 0
  %134 = vmatpush1.bf16.msra.mxu0 0
  %135 = vmatprep.subr.bf16.mxu0 0
  %136 = vmatpush1.bf16.msra.mxu0 0
  %137 = vmatprep.subr.bf16.mxu0 0
  %138 = vmatpush1.bf16.msra.mxu0 0
  %139 = vmatprep.subr.bf16.mxu0 0
  %140 = vmatpush1.bf16.msra.mxu0 %v123
  %141 = vmatprep.subr.bf16.mxu0 0
  %142 = vmatpush2.bf16.msra.mxu0 0
  %143 = vmatprep.subr.bf16.mxu0 0
  %144 = vmatpush2.bf16.msra.mxu0 0
  %145 = vmatprep.subr.bf16.mxu0 0
  %146 = vmatpush2.bf16.msra.mxu0 0
  %147 = vmatprep.subr.bf16.mxu0 0
  %148 = vmatpush2.bf16.msra.mxu0 0
  %149 = vmatprep.subr.bf16.mxu0 0
  %150 = vmatpush2.bf16.msra.mxu0 0
  %151 = vmatprep.subr.bf16.mxu0 0
  %152 = vmatpush2.bf16.msra.mxu0 0
  %153 = vmatprep.subr.bf16.mxu0 0
  %154 = vmatpush2.bf16.msra.mxu0 0
  %155 = vmatprep.subr.bf16.mxu0 0
  %156 = vmatpush2.bf16.msra.mxu0 0
  %157 = vmatprep.mubr.bf16.mxu0 0
  %158 = vmatmul.mubr.bf16.gmra.mxu0 %v116
  %v159 = vpop.f32.mrf.mxu0
  %v160 = vadd.f32 %v104, %v159
  %v161 = vpop.f32.mrf.mxu0
  %v162 = vpop.f32.mrf.mxu0
  %v163 = vpop.f32.mrf.mxu0
  %164 = vdwg.mxu0
  %165 = vst [vmem:[%s4] sm:$0x3] %v160
  // Predicated region
  $region18: #{_forward_impl.3} parent=0 // pred_check
    _
  $region19: #{_forward_impl.3} parent=0 // pred_check_branch
    %167 = sbr.rel (0) target = $region21
  $region20: #{_forward_impl.3} parent=0 // pred_region
    _
  $region21: #{_forward_impl.3} parent=0 // pred_fallthru
    _
  // Predicated region
  $region22: #{_forward_impl.3} parent=0 // pred_check
    _
  $region23: #{_forward_impl.3} parent=0 // pred_check_branch
    %169 = sbr.rel (0) target = $region25
  $region24: #{_forward_impl.3} parent=0 // pred_region
    _
  $region25: #{_forward_impl.3} parent=0 // pred_fallthru
    _

</llo_original>
